<compile_context>
chip_gen: v6e
topology: v6e:2x2x1
jax: 0.10.0
libtpu: 0.0.40
codegen_flags: <defaults>
</compile_context>

<pallas_src>
import jax
import jax.numpy as jnp
from jax.experimental import pallas as pl
from jax.experimental.pallas import tpu as pltpu


def mlp_deep_kernel(x_ref, w1_ref, b1_ref, w2_ref, b2_ref, w3_ref, b3_ref,
                    o_ref, h1_ref, h2_ref):
    # fc1 + ReLU  -> VMEM scratch h1 (TM, 512)
    h1_ref[...] = jnp.maximum(
        jnp.dot(x_ref[...], w1_ref[...], preferred_element_type=jnp.float32)
        + b1_ref[...], 0.0)
    # fc2 + ReLU  -> VMEM scratch h2 (TM, 256)
    h2_ref[...] = jnp.maximum(
        jnp.dot(h1_ref[...], w2_ref[...], preferred_element_type=jnp.float32)
        + b2_ref[...], 0.0)
    # fc3 (no activation) -> lane-dense (TM, 128) output slab
    o_ref[...] = (
        jnp.dot(h2_ref[...], w3_ref[...], preferred_element_type=jnp.float32)
        + b3_ref[...]
    ).astype(o_ref.dtype)


def mlp_deep_forward(x, params, block_m=256):
    """x: (batch, input_dim) f32. params: dict of w1,b1,w2,b2,w3,b3."""
    w1, b1 = params["w1"], params["b1"]
    w2, b2 = params["w2"], params["b2"]
    w3, b3 = params["w3"], params["b3"]

    batch, input_dim = x.shape
    hidden1 = w1.shape[1]          # 512
    hidden2 = w2.shape[1]          # 256
    num_classes = w3.shape[1]      # e.g. 10

    # --- Lane-dense output: pad num_classes up to a multiple of 128 ----------
    n_pad = max(128, ((num_classes + 127) // 128) * 128)
    w3p = jnp.zeros((hidden2, n_pad), w3.dtype).at[:, :num_classes].set(w3)
    b3p = jnp.zeros((1, n_pad), b3.dtype).at[:, :num_classes].set(b3)

    # --- Batch tiling: TM=256 (v6e/v7x MXU height) but adapt for tiny batches --
    tm = min(block_m, ((batch + 7) // 8) * 8)      # multiple of 8 (sublane)
    m_pad = ((batch + tm - 1) // tm) * tm
    if m_pad != batch:
        x = jnp.pad(x, ((0, m_pad - batch), (0, 0)))

    grid = (m_pad // tm,)

    # Advisory cost estimate for XLA's scheduler.
    flops = 2 * m_pad * (input_dim * hidden1 + hidden1 * hidden2 + hidden2 * n_pad)
    bytes_accessed = 4 * (
        m_pad * input_dim + m_pad * n_pad
        + input_dim * hidden1 + hidden1 * hidden2 + hidden2 * n_pad
        + hidden1 + hidden2 + n_pad
    )

    out_padded = pl.pallas_call(
        mlp_deep_kernel,
        out_shape=jax.ShapeDtypeStruct((m_pad, n_pad), jnp.float32),
        grid=grid,
        in_specs=[
            # x tile marches over the batch; weights/biases stay resident.
            pl.BlockSpec((tm, input_dim), lambda i: (i, 0)),
            pl.BlockSpec((input_dim, hidden1), lambda i: (0, 0)),
            pl.BlockSpec((1, hidden1), lambda i: (0, 0)),
            pl.BlockSpec((hidden1, hidden2), lambda i: (0, 0)),
            pl.BlockSpec((1, hidden2), lambda i: (0, 0)),
            pl.BlockSpec((hidden2, n_pad), lambda i: (0, 0)),
            pl.BlockSpec((1, n_pad), lambda i: (0, 0)),
        ],
        out_specs=pl.BlockSpec((tm, n_pad), lambda i: (i, 0)),
        scratch_shapes=[
            pltpu.VMEM((tm, hidden1), jnp.float32),   # h1
            pltpu.VMEM((tm, hidden2), jnp.float32),   # h2
        ],
        compiler_params=pltpu.CompilerParams(
            dimension_semantics=("parallel",)),
        cost_estimate=pl.CostEstimate(
            flops=flops, transcendentals=0, bytes_accessed=bytes_accessed),
    )(x, w1, b1, w2, b2, w3p, b3p)

    # Strip the batch padding and the lane padding of the classes dim.
    return out_padded[:batch, :num_classes]


def init_params(key, input_dim, num_classes):
    """Deterministic synthetic params; shapes mirror nn.Linear layers of MLP_Deep."""
    ks = jax.random.split(key, 6)

    def linear(kw, kb, fan_in, fan_out):
        bound = 1.0 / jnp.sqrt(fan_in)
        w = jax.random.uniform(kw, (fan_in, fan_out), jnp.float32, -bound, bound)
        b = jax.random.uniform(kb, (1, fan_out), jnp.float32, -bound, bound)
        return w, b

    w1, b1 = linear(ks[0], ks[1], input_dim, 512)
    w2, b2 = linear(ks[2], ks[3], 512, 256)
    w3, b3 = linear(ks[4], ks[5], 256, num_classes)
    return {"w1": w1, "b1": b1, "w2": w2, "b2": b2, "w3": w3, "b3": b3}


def reference_forward(x, params):
    h1 = jnp.maximum(x @ params["w1"] + params["b1"], 0.0)
    h2 = jnp.maximum(h1 @ params["w2"] + params["b2"], 0.0)
    return h2 @ params["w3"] + params["b3"]


if __name__ == "__main__":
    key = jax.random.PRNGKey(0)
    k_x, k_p = jax.random.split(key)

    batch = 8
    input_dim = 32      # tabular feature dim
    num_classes = 10

    x = jax.random.normal(k_x, (batch, input_dim), jnp.float32)
    params = init_params(k_p, input_dim, num_classes)

    out = mlp_deep_forward(x, params)
    out = jax.block_until_ready(out)

    # sanity check against pure-JAX reference
    ref = reference_forward(x, params)
    assert out.shape == (batch, num_classes)
    assert jnp.allclose(out, ref, atol=1e-4, rtol=1e-4), "mismatch vs reference"

    # also exercise a batch that actually spans multiple grid steps
    xb = jax.random.normal(k_x, (1000, input_dim), jnp.float32)
    outb = jax.block_until_ready(mlp_deep_forward(xb, params))
    refb = reference_forward(xb, params)
    assert outb.shape == (1000, num_classes)
    assert jnp.allclose(outb, refb, atol=1e-4, rtol=1e-4), "mismatch (tiled batch)"

    print("KERNEL_OK")
</pallas_src>

<mosaic_0001>
module attributes {stable_mosaic.version = 11 : i64} {
  func.func @mlp_deep_kernel(%arg0: i32, %arg1: memref<8x32xf32, #tpu.memory_space<vmem>>, %arg2: memref<32x512xf32, #tpu.memory_space<vmem>>, %arg3: memref<1x512xf32, #tpu.memory_space<vmem>>, %arg4: memref<512x256xf32, #tpu.memory_space<vmem>>, %arg5: memref<1x256xf32, #tpu.memory_space<vmem>>, %arg6: memref<256x128xf32, #tpu.memory_space<vmem>>, %arg7: memref<1x128xf32, #tpu.memory_space<vmem>>, %arg8: memref<8x128xf32, #tpu.memory_space<vmem>>, %arg9: memref<8x512xf32, #tpu.memory_space<vmem>>, %arg10: memref<8x256xf32, #tpu.memory_space<vmem>>) attributes {dimension_semantics = [#tpu.dimension_semantics<parallel>], iteration_bounds = array<i64: 1>, scalar_prefetch = 0 : i64, scratch_operands = 2 : i64, tpu.core_type = #tpu.core_type<tc>, window_params = [{transform_indices = @transform_0, window_bounds = array<i64: 8, 32>}, {pipeline_mode = #tpu.pipeline_mode<synchronous>, transform_indices = @transform_1, window_bounds = array<i64: 32, 512>}, {pipeline_mode = #tpu.pipeline_mode<synchronous>, transform_indices = @transform_2, window_bounds = array<i64: 1, 512>}, {pipeline_mode = #tpu.pipeline_mode<synchronous>, transform_indices = @transform_3, window_bounds = array<i64: 512, 256>}, {pipeline_mode = #tpu.pipeline_mode<synchronous>, transform_indices = @transform_4, window_bounds = array<i64: 1, 256>}, {pipeline_mode = #tpu.pipeline_mode<synchronous>, transform_indices = @transform_5, window_bounds = array<i64: 256, 128>}, {pipeline_mode = #tpu.pipeline_mode<synchronous>, transform_indices = @transform_6, window_bounds = array<i64: 1, 128>}, {transform_indices = @transform_7, window_bounds = array<i64: 8, 128>}]} {
    %c0 = arith.constant 0 : index
    %c0_0 = arith.constant 0 : index
    %0 = vector.load %arg1[%c0, %c0_0] : memref<8x32xf32, #tpu.memory_space<vmem>>, vector<8x32xf32>
    %c0_1 = arith.constant 0 : index
    %c0_2 = arith.constant 0 : index
    %1 = vector.load %arg2[%c0_1, %c0_2] : memref<32x512xf32, #tpu.memory_space<vmem>>, vector<32x512xf32>
    %cst = arith.constant dense<0.000000e+00> : vector<8x512xf32>
    %2 = tpu.matmul %0, %1, %cst {dimension_numbers = #tpu.dot_dimension_numbers<[1], [0], [0], [1], [0, 0, 1, 1], [], []>} : vector<8x32xf32>, vector<32x512xf32>, vector<8x512xf32> -> vector<8x512xf32>
    %c0_3 = arith.constant 0 : index
    %c0_4 = arith.constant 0 : index
    %3 = vector.load %arg3[%c0_3, %c0_4] : memref<1x512xf32, #tpu.memory_space<vmem>>, vector<1x512xf32>
    %4 = vector.broadcast %3 : vector<1x512xf32> to vector<8x512xf32>
    %5 = arith.addf %2, %4 : vector<8x512xf32>
    %cst_5 = arith.constant 0.000000e+00 : f32
    %6 = vector.broadcast %cst_5 : f32 to vector<8x512xf32>
    %7 = arith.maximumf %5, %6 : vector<8x512xf32>
    %c0_6 = arith.constant 0 : index
    %c0_7 = arith.constant 0 : index
    %8 = vector.load %arg9[%c0_6, %c0_7] : memref<8x512xf32, #tpu.memory_space<vmem>>, vector<8x512xf32>
    tpu.vector_store %arg9[%c0_6, %c0_7], %7 {strides = array<i32>} : memref<8x512xf32, #tpu.memory_space<vmem>>, vector<8x512xf32>,
    %c0_8 = arith.constant 0 : index
    %c0_9 = arith.constant 0 : index
    %9 = vector.load %arg9[%c0_8, %c0_9] : memref<8x512xf32, #tpu.memory_space<vmem>>, vector<8x512xf32>
    %c0_10 = arith.constant 0 : index
    %c0_11 = arith.constant 0 : index
    %10 = vector.load %arg4[%c0_10, %c0_11] : memref<512x256xf32, #tpu.memory_space<vmem>>, vector<512x256xf32>
    %cst_12 = arith.constant dense<0.000000e+00> : vector<8x256xf32>
    %11 = tpu.matmul %9, %10, %cst_12 {dimension_numbers = #tpu.dot_dimension_numbers<[1], [0], [0], [1], [0, 0, 1, 1], [], []>} : vector<8x512xf32>, vector<512x256xf32>, vector<8x256xf32> -> vector<8x256xf32>
    %c0_13 = arith.constant 0 : index
    %c0_14 = arith.constant 0 : index
    %12 = vector.load %arg5[%c0_13, %c0_14] : memref<1x256xf32, #tpu.memory_space<vmem>>, vector<1x256xf32>
    %13 = vector.broadcast %12 : vector<1x256xf32> to vector<8x256xf32>
    %14 = arith.addf %11, %13 : vector<8x256xf32>
    %cst_15 = arith.constant 0.000000e+00 : f32
    %15 = vector.broadcast %cst_15 : f32 to vector<8x256xf32>
    %16 = arith.maximumf %14, %15 : vector<8x256xf32>
    %c0_16 = arith.constant 0 : index
    %c0_17 = arith.constant 0 : index
    %17 = vector.load %arg10[%c0_16, %c0_17] : memref<8x256xf32, #tpu.memory_space<vmem>>, vector<8x256xf32>
    tpu.vector_store %arg10[%c0_16, %c0_17], %16 {strides = array<i32>} : memref<8x256xf32, #tpu.memory_space<vmem>>, vector<8x256xf32>,
    %c0_18 = arith.constant 0 : index
    %c0_19 = arith.constant 0 : index
    %18 = vector.load %arg10[%c0_18, %c0_19] : memref<8x256xf32, #tpu.memory_space<vmem>>, vector<8x256xf32>
    %c0_20 = arith.constant 0 : index
    %c0_21 = arith.constant 0 : index
    %19 = vector.load %arg6[%c0_20, %c0_21] : memref<256x128xf32, #tpu.memory_space<vmem>>, vector<256x128xf32>
    %cst_22 = arith.constant dense<0.000000e+00> : vector<8x128xf32>
    %20 = tpu.matmul %18, %19, %cst_22 {dimension_numbers = #tpu.dot_dimension_numbers<[1], [0], [0], [1], [0, 0, 1, 1], [], []>} : vector<8x256xf32>, vector<256x128xf32>, vector<8x128xf32> -> vector<8x128xf32>
    %c0_23 = arith.constant 0 : index
    %c0_24 = arith.constant 0 : index
    %21 = vector.load %arg7[%c0_23, %c0_24] : memref<1x128xf32, #tpu.memory_space<vmem>>, vector<1x128xf32>
    %22 = vector.broadcast %21 : vector<1x128xf32> to vector<8x128xf32>
    %23 = arith.addf %20, %22 : vector<8x128xf32>
    %c0_25 = arith.constant 0 : index
    %c0_26 = arith.constant 0 : index
    %24 = vector.load %arg8[%c0_25, %c0_26] : memref<8x128xf32, #tpu.memory_space<vmem>>, vector<8x128xf32>
    tpu.vector_store %arg8[%c0_25, %c0_26], %23 {strides = array<i32>} : memref<8x128xf32, #tpu.memory_space<vmem>>, vector<8x128xf32>,
    return
  }
  func.func @transform_0(%arg0: i32) -> (i32, i32) {
    %c0_i32 = arith.constant 0 : i32
    %c0_i32_0 = arith.constant 0 : i32
    return %arg0, %c0_i32 : i32, i32
  }
  func.func @transform_1(%arg0: i32) -> (i32, i32) {
    %c0_i32 = arith.constant 0 : i32
    %c0_i32_0 = arith.constant 0 : i32
    %c0_i32_1 = arith.constant 0 : i32
    return %c0_i32, %c0_i32_0 : i32, i32
  }
  func.func @transform_2(%arg0: i32) -> (i32, i32) {
    %c0_i32 = arith.constant 0 : i32
    %c0_i32_0 = arith.constant 0 : i32
    %c0_i32_1 = arith.constant 0 : i32
    return %c0_i32, %c0_i32_0 : i32, i32
  }
  func.func @transform_3(%arg0: i32) -> (i32, i32) {
    %c0_i32 = arith.constant 0 : i32
    %c0_i32_0 = arith.constant 0 : i32
    %c0_i32_1 = arith.constant 0 : i32
    return %c0_i32, %c0_i32_0 : i32, i32
  }
  func.func @transform_4(%arg0: i32) -> (i32, i32) {
    %c0_i32 = arith.constant 0 : i32
    %c0_i32_0 = arith.constant 0 : i32
    %c0_i32_1 = arith.constant 0 : i32
    return %c0_i32, %c0_i32_0 : i32, i32
  }
  func.func @transform_5(%arg0: i32) -> (i32, i32) {
    %c0_i32 = arith.constant 0 : i32
    %c0_i32_0 = arith.constant 0 : i32
    %c0_i32_1 = arith.constant 0 : i32
    return %c0_i32, %c0_i32_0 : i32, i32
  }
  func.func @transform_6(%arg0: i32) -> (i32, i32) {
    %c0_i32 = arith.constant 0 : i32
    %c0_i32_0 = arith.constant 0 : i32
    %c0_i32_1 = arith.constant 0 : i32
    return %c0_i32, %c0_i32_0 : i32, i32
  }
  func.func @transform_7(%arg0: i32) -> (i32, i32) {
    %c0_i32 = arith.constant 0 : i32
    %c0_i32_0 = arith.constant 0 : i32
    return %arg0, %c0_i32 : i32, i32
  }
}

</mosaic_0001>

<llo_original>
// kernel: tpu_custom_call.1
$region0: #{tpu_custom_call.1}
  #allocation0 [shape = 'u32[]', space=smem, size = 0x4, offset = 0x4, fixed_abs, tag = 'smem constant byte address 0x4 - core index']
  #allocation1 [shape = 'u32[144,128]{1,0:T(1,128)}', space=vmem, size = 0x12000, scoped, tag = 'internal scratch']
  #allocation2 [shape = 'f32[8,512]{1,0:T(8,128)}', space=vmem, size = 0x4000, scoped, tag = 'scratch operand']
  #allocation3 [shape = 'f32[8,256]{1,0:T(8,128)}', space=vmem, size = 0x2000, scoped, tag = 'scratch operand']
  %s0 = inlined_call_operand.hbm [shape: f32[8,32], index: 0, kind: input, shape index: {}]
  %s1 = inlined_call_operand.hbm [shape: f32[32,512], index: 1, kind: input, shape index: {}]
  %s2 = inlined_call_operand.hbm [shape: f32[1,512], index: 2, kind: input, shape index: {}]
  %s3 = inlined_call_operand.hbm [shape: f32[512,256], index: 3, kind: input, shape index: {}]
  %s4 = inlined_call_operand.vmem [shape: f32[1,256], index: 4, kind: input, shape index: {}]
  %s5 = inlined_call_operand.hbm [shape: f32[256,128], index: 5, kind: input, shape index: {}]
  %s6 = inlined_call_operand.vmem [shape: f32[1,128], index: 6, kind: input, shape index: {}]
  %s7 = inlined_call_operand.hbm [shape: f32[8,128], index: 7, kind: output, shape index: {}]
  %s8 = sld [smem:[#allocation0]]
  $region58: #{tpu_custom_call.1} parent=0
    _
  %s10 = ssub.s32 1, %s8
  %s11 = scalar_select 0, %s10, %s8
  $region1: #{tpu_custom_call.1} parent=0
    #allocation4 [shape = 'u8[4096]{0}', space=vmem, size = 0x1000, scoped, tag = 'input window, operand 0, single buffered']
    #allocation5 [shape = 's32[1]{0}', space=sflag, size = 0x4, scoped, tag = 'scoped memory for tpu_custom_call.1']
    #allocation6 [shape = 's32[1]{0}', space=sflag, size = 0x4, scoped, tag = 'scoped memory for tpu_custom_call.1']
    #allocation7 [shape = 'u8[65536]{0}', space=vmem, size = 0x10000, scoped, tag = 'input window, operand 1, single buffered']
    #allocation8 [shape = 's32[1]{0}', space=sflag, size = 0x4, scoped, tag = 'scoped memory for tpu_custom_call.1']
    #allocation9 [shape = 'u8[2048]{0}', space=vmem, size = 0x800, scoped, tag = 'input window, operand 2, single buffered']
    #allocation10 [shape = 'u8[524288]{0}', space=vmem, size = 0x80000, scoped, tag = 'input window, operand 3, single buffered']
    #allocation11 [shape = 's32[1]{0}', space=sflag, size = 0x4, scoped, tag = 'scoped memory for tpu_custom_call.1']
    #allocation12 [shape = 'u8[131072]{0}', space=vmem, size = 0x20000, scoped, tag = 'input window, operand 5, single buffered']
    #allocation13 [shape = 'u8[4096]{0}', space=vmem, size = 0x1000, scoped, tag = 'output window, operand 0, single buffered']
    %12 = vsyncpa [#allocation5], 0
    %13 = vsyncpa [#allocation8], 0
    %14 = vsyncpa [#allocation11], 0
    %15 = vsyncpa [#allocation6], 0
    // Predicated region
    $region2: #{tpu_custom_call.1} parent=1 // pred_check
      _
    $region3: #{tpu_custom_call.1} parent=1 // pred_check_branch
      %17 = sbr.rel (0) target = $region5
    $region4: #{tpu_custom_call.1} parent=1 // pred_region
      %s19 = ssub.s32 128, 128
      %20 = vsyncadd [#allocation5], %s19
      %s22 = sshll.u32 [#allocation4], 4
      %s23 = int_to_ptr.vmem [resolvable:$true] %s22
      %25 = dma.hbm_to_vmem [thread:$0]  %s0, 128, %s23, [#allocation5]
    $region5: #{tpu_custom_call.1} parent=1 // pred_fallthru
      _
    // Predicated region
    $region6: #{tpu_custom_call.1} parent=1 // pred_check
      _
    $region7: #{tpu_custom_call.1} parent=1 // pred_check_branch
      %27 = sbr.rel (0) target = $region9
    $region8: #{tpu_custom_call.1} parent=1 // pred_region
      %s29 = ssub.s32 2048, 2048
      %30 = vsyncadd [#allocation8], %s29
      %s31 = sshll.u32 [#allocation7], 4
      %s32 = int_to_ptr.vmem [resolvable:$true] %s31
      %37 = dma.hbm_to_vmem [thread:$0]  %s1, 2048, %s32, [#allocation8], 512, 512, 32
    $region9: #{tpu_custom_call.1} parent=1 // pred_fallthru
      _
    // Predicated region
    $region10: #{tpu_custom_call.1} parent=1 // pred_check
      _
    $region11: #{tpu_custom_call.1} parent=1 // pred_check_branch
      %39 = sbr.rel (0) target = $region13
    $region12: #{tpu_custom_call.1} parent=1 // pred_region
      %s41 = ssub.s32 64, 64
      %42 = vsyncadd [#allocation8], %s41
      %s44 = sshll.u32 [#allocation9], 4
      %s45 = int_to_ptr.vmem [resolvable:$true] %s44
      %47 = dma.hbm_to_vmem [thread:$0]  %s2, 64, %s45, [#allocation8]
    $region13: #{tpu_custom_call.1} parent=1 // pred_fallthru
      _
    // Predicated region
    $region14: #{tpu_custom_call.1} parent=1 // pred_check
      _
    $region15: #{tpu_custom_call.1} parent=1 // pred_check_branch
      %49 = sbr.rel (0) target = $region17
    $region16: #{tpu_custom_call.1} parent=1 // pred_region
      %s51 = ssub.s32 16384, 16384
      %52 = vsyncadd [#allocation11], %s51
      %s53 = sshll.u32 [#allocation10], 4
      %s54 = int_to_ptr.vmem [resolvable:$true] %s53
      %59 = dma.hbm_to_vmem [thread:$0]  %s3, 16384, %s54, [#allocation11], 256, 256, 16
    $region17: #{tpu_custom_call.1} parent=1 // pred_fallthru
      _
    // Predicated region
    $region18: #{tpu_custom_call.1} parent=1 // pred_check
      _
    $region19: #{tpu_custom_call.1} parent=1 // pred_check_branch
      %61 = sbr.rel (0) target = $region21
    $region20: #{tpu_custom_call.1} parent=1 // pred_region
      _
    $region21: #{tpu_custom_call.1} parent=1 // pred_fallthru
      _
    // Predicated region
    $region22: #{tpu_custom_call.1} parent=1 // pred_check
      _
    $region23: #{tpu_custom_call.1} parent=1 // pred_check_branch
      %63 = sbr.rel (0) target = $region25
    $region24: #{tpu_custom_call.1} parent=1 // pred_region
      %s65 = ssub.s32 4096, 4096
      %66 = vsyncadd [#allocation11], %s65
      %s67 = sshll.u32 [#allocation12], 4
      %s68 = int_to_ptr.vmem [resolvable:$true] %s67
      %73 = dma.hbm_to_vmem [thread:$0]  %s5, 4096, %s68, [#allocation11], 128, 128, 8
    $region25: #{tpu_custom_call.1} parent=1 // pred_fallthru
      _
    // Predicated region
    $region26: #{tpu_custom_call.1} parent=1 // pred_check
      _
    $region27: #{tpu_custom_call.1} parent=1 // pred_check_branch
      %75 = sbr.rel (0) target = $region29
    $region28: #{tpu_custom_call.1} parent=1 // pred_region
      _
    $region29: #{tpu_custom_call.1} parent=1 // pred_fallthru
      _
    // Predicated region
    $region30: #{tpu_custom_call.1} parent=1 // pred_check
      _
    $region31: #{tpu_custom_call.1} parent=1 // pred_check_branch
      %77 = sbr.rel (0) target = $region33
    $region32: #{tpu_custom_call.1} parent=1 // pred_region
      %78 = dma.done [#allocation5], 128
    $region33: #{tpu_custom_call.1} parent=1 // pred_fallthru
      _
    // Predicated region
    $region34: #{tpu_custom_call.1} parent=1 // pred_check
      _
    $region35: #{tpu_custom_call.1} parent=1 // pred_check_branch
      %80 = sbr.rel (0) target = $region37
    $region36: #{tpu_custom_call.1} parent=1 // pred_region
      %81 = dma.done [#allocation8], 2048
    $region37: #{tpu_custom_call.1} parent=1 // pred_fallthru
      _
    // Predicated region
    $region38: #{tpu_custom_call.1} parent=1 // pred_check
      _
    $region39: #{tpu_custom_call.1} parent=1 // pred_check_branch
      %83 = sbr.rel (0) target = $region41
    $region40: #{tpu_custom_call.1} parent=1 // pred_region
      %84 = dma.done [#allocation8], 64
    $region41: #{tpu_custom_call.1} parent=1 // pred_fallthru
      _
    // Predicated region
    $region42: #{tpu_custom_call.1} parent=1 // pred_check
      _
    $region43: #{tpu_custom_call.1} parent=1 // pred_check_branch
      %86 = sbr.rel (0) target = $region45
    $region44: #{tpu_custom_call.1} parent=1 // pred_region
      %87 = dma.done [#allocation11], 16384
    $region45: #{tpu_custom_call.1} parent=1 // pred_fallthru
      _
    // Predicated region
    $region46: #{tpu_custom_call.1} parent=1 // pred_check
      _
    $region47: #{tpu_custom_call.1} parent=1 // pred_check_branch
      %89 = sbr.rel (0) target = $region49
    $region48: #{tpu_custom_call.1} parent=1 // pred_region
      %90 = dma.done [#allocation11], 4096
    $region49: #{tpu_custom_call.1} parent=1 // pred_fallthru
      _
    %v91 = vld [vmem:[#allocation4] sm:$0xff]
    %v92 = vld [vmem:[#allocation7] sm:$0xff]
    %v93 = vld [vmem:[#allocation7 + $0x8] sm:$0xff]
    %v94 = vld [vmem:[#allocation7 + $0x10] sm:$0xff]
    %v95 = vld [vmem:[#allocation7 + $0x18] sm:$0xff]
    %v96 = vld [vmem:[#allocation7 + $0x20] sm:$0xff]
    %v97 = vld [vmem:[#allocation7 + $0x28] sm:$0xff]
    %v98 = vld [vmem:[#allocation7 + $0x30] sm:$0xff]
    %v99 = vld [vmem:[#allocation7 + $0x38] sm:$0xff]
    %v100 = vld [vmem:[#allocation7 + $0x40] sm:$0xff]
    %v101 = vld [vmem:[#allocation7 + $0x48] sm:$0xff]
    %v102 = vld [vmem:[#allocation7 + $0x50] sm:$0xff]
    %v103 = vld [vmem:[#allocation7 + $0x58] sm:$0xff]
    %v104 = vld [vmem:[#allocation7 + $0x60] sm:$0xff]
    %v105 = vld [vmem:[#allocation7 + $0x68] sm:$0xff]
    %v106 = vld [vmem:[#allocation7 + $0x70] sm:$0xff]
    %v107 = vld [vmem:[#allocation7 + $0x78] sm:$0xff]
    %v108 = vld [vmem:[#allocation9] sm:$0xf]
    %v110 = vlaneseq
    %v111 = vshrl.u32 %v110, 7
    %v112 = vsub.s32 0, %v111
    %v113 = vrot.slane %v108, %v112
    %v114 = vlaneseq
    %v115 = vshrl.u32 %v114, 7
    %v116 = vsub.s32 1, %v115
    %v117 = vrot.slane %v108, %v116
    %v118 = vlaneseq
    %v119 = vshrl.u32 %v118, 7
    %v120 = vsub.s32 2, %v119
    %v121 = vrot.slane %v108, %v120
    %v122 = vlaneseq
    %v123 = vshrl.u32 %v122, 7
    %v124 = vsub.s32 3, %v123
    %v125 = vrot.slane %v108, %v124
    %vm130 = vcmask 261120
    %v132 = vsel %vm130, %v91, 0
    %134 = vmatprep.subr.mxu0 0.0
    %135 = vmatpush1.msra.mxu0 0.0
    %136 = vmatprep.subr.mxu0 0.0
    %137 = vmatpush1.msra.mxu0 0.0
    %138 = vmatprep.subr.mxu0 0.0
    %139 = vmatpush1.msra.mxu0 0.0
    %140 = vmatprep.subr.mxu0 0.0
    %141 = vmatpush1.msra.mxu0 0.0
    %142 = vmatprep.subr.mxu0 0.0
    %143 = vmatpush1.msra.mxu0 0.0
    %144 = vmatprep.subr.mxu0 0.0
    %145 = vmatpush1.msra.mxu0 0.0
    %146 = vmatprep.subr.mxu0 0.0
    %147 = vmatpush1.msra.mxu0 0.0
    %148 = vmatprep.subr.mxu0 0.0
    %149 = vmatpush1.msra.mxu0 0.0
    %150 = vmatprep.subr.mxu0 0.0
    %151 = vmatpush1.msra.mxu0 0.0
    %152 = vmatprep.subr.mxu0 0.0
    %153 = vmatpush1.msra.mxu0 0.0
    %154 = vmatprep.subr.mxu0 0.0
    %155 = vmatpush1.msra.mxu0 0.0
    %156 = vmatprep.subr.mxu0 0.0
    %157 = vmatpush1.msra.mxu0 0.0
    %158 = vmatprep.subr.mxu0 %v105
    %159 = vmatpush1.msra.mxu0 %v104
    %160 = vmatprep.subr.mxu0 %v101
    %161 = vmatpush1.msra.mxu0 %v100
    %162 = vmatprep.subr.mxu0 %v97
    %163 = vmatpush1.msra.mxu0 %v96
    %164 = vmatprep.subr.mxu0 %v93
    %165 = vmatpush1.msra.mxu0 %v92
    %166 = vmatprep.subr.mxu0 0.0
    %167 = vmatpush2.msra.mxu0 0.0
    %168 = vmatprep.subr.mxu0 0.0
    %169 = vmatpush2.msra.mxu0 0.0
    %170 = vmatprep.subr.mxu0 0.0
    %171 = vmatpush2.msra.mxu0 0.0
    %172 = vmatprep.subr.mxu0 0.0
    %173 = vmatpush2.msra.mxu0 0.0
    %174 = vmatprep.subr.mxu0 0.0
    %175 = vmatpush2.msra.mxu0 0.0
    %176 = vmatprep.subr.mxu0 0.0
    %177 = vmatpush2.msra.mxu0 0.0
    %178 = vmatprep.subr.mxu0 0.0
    %179 = vmatpush2.msra.mxu0 0.0
    %180 = vmatprep.subr.mxu0 0.0
    %181 = vmatpush2.msra.mxu0 0.0
    %182 = vmatprep.subr.mxu0 0.0
    %183 = vmatpush2.msra.mxu0 0.0
    %184 = vmatprep.subr.mxu0 0.0
    %185 = vmatpush2.msra.mxu0 0.0
    %186 = vmatprep.subr.mxu0 0.0
    %187 = vmatpush2.msra.mxu0 0.0
    %188 = vmatprep.subr.mxu0 0.0
    %189 = vmatpush2.msra.mxu0 0.0
    %190 = vmatprep.subr.mxu0 0.0
    %191 = vmatpush2.msra.mxu0 0.0
    %192 = vmatprep.subr.mxu0 0.0
    %193 = vmatpush2.msra.mxu0 0.0
    %194 = vmatprep.subr.mxu0 0.0
    %195 = vmatpush2.msra.mxu0 0.0
    %196 = vmatprep.subr.mxu0 0.0
    %197 = vmatpush2.msra.mxu0 0.0
    %198 = vmatprep.mubr.f32.mxu0 0.0
    %199 = vmatmul.mubr.f32.gmra.mxu0 %v132
    %v200 = vpop.f32.mrf.mxu0
    %v201 = vadd.f32 %v113, %v200
    %v202 = vpop.f32.mrf.mxu0
    %v203 = vadd.f32 %v117, %v202
    %204 = vdwg.mxu0
    %205 = vmatprep.subr.mxu0 0.0
    %206 = vmatpush1.msra.mxu0 0.0
    %207 = vmatprep.subr.mxu0 0.0
    %208 = vmatpush1.msra.mxu0 0.0
    %209 = vmatprep.subr.mxu0 0.0
    %210 = vmatpush1.msra.mxu0 0.0
    %211 = vmatprep.subr.mxu0 0.0
    %212 = vmatpush1.msra.mxu0 0.0
    %213 = vmatprep.subr.mxu0 0.0
    %214 = vmatpush1.msra.mxu0 0.0
    %215 = vmatprep.subr.mxu0 0.0
    %216 = vmatpush1.msra.mxu0 0.0
    %217 = vmatprep.subr.mxu0 0.0
    %218 = vmatpush1.msra.mxu0 0.0
    %219 = vmatprep.subr.mxu0 0.0
    %220 = vmatpush1.msra.mxu0 0.0
    %221 = vmatprep.subr.mxu0 0.0
    %222 = vmatpush1.msra.mxu0 0.0
    %223 = vmatprep.subr.mxu0 0.0
    %224 = vmatpush1.msra.mxu0 0.0
    %225 = vmatprep.subr.mxu0 0.0
    %226 = vmatpush1.msra.mxu0 0.0
    %227 = vmatprep.subr.mxu0 0.0
    %228 = vmatpush1.msra.mxu0 0.0
    %229 = vmatprep.subr.mxu0 %v107
    %230 = vmatpush1.msra.mxu0 %v106
    %231 = vmatprep.subr.mxu0 %v103
    %232 = vmatpush1.msra.mxu0 %v102
    %233 = vmatprep.subr.mxu0 %v99
    %234 = vmatpush1.msra.mxu0 %v98
    %235 = vmatprep.subr.mxu0 %v95
    %236 = vmatpush1.msra.mxu0 %v94
    %237 = vmatprep.subr.mxu0 0.0
    %238 = vmatpush2.msra.mxu0 0.0
    %239 = vmatprep.subr.mxu0 0.0
    %240 = vmatpush2.msra.mxu0 0.0
    %241 = vmatprep.subr.mxu0 0.0
    %242 = vmatpush2.msra.mxu0 0.0
    %243 = vmatprep.subr.mxu0 0.0
    %244 = vmatpush2.msra.mxu0 0.0
    %245 = vmatprep.subr.mxu0 0.0
    %246 = vmatpush2.msra.mxu0 0.0
    %247 = vmatprep.subr.mxu0 0.0
    %248 = vmatpush2.msra.mxu0 0.0
    %249 = vmatprep.subr.mxu0 0.0
    %250 = vmatpush2.msra.mxu0 0.0
    %251 = vmatprep.subr.mxu0 0.0
    %252 = vmatpush2.msra.mxu0 0.0
    %253 = vmatprep.subr.mxu0 0.0
    %254 = vmatpush2.msra.mxu0 0.0
    %255 = vmatprep.subr.mxu0 0.0
    %256 = vmatpush2.msra.mxu0 0.0
    %257 = vmatprep.subr.mxu0 0.0
    %258 = vmatpush2.msra.mxu0 0.0
    %259 = vmatprep.subr.mxu0 0.0
    %260 = vmatpush2.msra.mxu0 0.0
    %261 = vmatprep.subr.mxu0 0.0
    %262 = vmatpush2.msra.mxu0 0.0
    %263 = vmatprep.subr.mxu0 0.0
    %264 = vmatpush2.msra.mxu0 0.0
    %265 = vmatprep.subr.mxu0 0.0
    %266 = vmatpush2.msra.mxu0 0.0
    %267 = vmatprep.subr.mxu0 0.0
    %268 = vmatpush2.msra.mxu0 0.0
    %269 = vmatprep.mubr.f32.mxu0 0.0
    %270 = vmatmul.mubr.f32.gmra.mxu0 %v132
    %v271 = vpop.f32.mrf.mxu0
    %v272 = vadd.f32 %v121, %v271
    %v273 = vpop.f32.mrf.mxu0
    %v274 = vadd.f32 %v125, %v273
    %275 = vdwg.mxu0
    %v276 = vmax.f32 %v201, 0.0
    %v277 = vmax.f32 %v203, 0.0
    %v278 = vmax.f32 %v272, 0.0
    %v279 = vmax.f32 %v274, 0.0
    %280 = vst [vmem:[#allocation2] sm:$0xff] %v276
    %281 = vst [vmem:[#allocation2 + $0x8] sm:$0xff] %v277
    %282 = vst [vmem:[#allocation2 + $0x10] sm:$0xff] %v278
    %283 = vst [vmem:[#allocation2 + $0x18] sm:$0xff] %v279
    %v284 = vld [vmem:[#allocation2] sm:$0xff]
    %v285 = vld [vmem:[#allocation2 + $0x8] sm:$0xff]
    %v286 = vld [vmem:[#allocation2 + $0x10] sm:$0xff]
    %v287 = vld [vmem:[#allocation2 + $0x18] sm:$0xff]
    %v288 = vld [vmem:[#allocation10] sm:$0xff]
    %v289 = vld [vmem:[#allocation10 + $0x8] sm:$0xff]
    %v290 = vld [vmem:[#allocation10 + $0x10] sm:$0xff]
    %v291 = vld [vmem:[#allocation10 + $0x18] sm:$0xff]
    %v292 = vld [vmem:[#allocation10 + $0x20] sm:$0xff]
    %v293 = vld [vmem:[#allocation10 + $0x28] sm:$0xff]
    %v294 = vld [vmem:[#allocation10 + $0x30] sm:$0xff]
    %v295 = vld [vmem:[#allocation10 + $0x38] sm:$0xff]
    %v296 = vld [vmem:[#allocation10 + $0x40] sm:$0xff]
    %v297 = vld [vmem:[#allocation10 + $0x48] sm:$0xff]
    %v298 = vld [vmem:[#allocation10 + $0x50] sm:$0xff]
    %v299 = vld [vmem:[#allocation10 + $0x58] sm:$0xff]
    %v300 = vld [vmem:[#allocation10 + $0x60] sm:$0xff]
    %v301 = vld [vmem:[#allocation10 + $0x68] sm:$0xff]
    %v302 = vld [vmem:[#allocation10 + $0x70] sm:$0xff]
    %v303 = vld [vmem:[#allocation10 + $0x78] sm:$0xff]
    %v304 = vld [vmem:[#allocation10 + $0x80] sm:$0xff]
    %v305 = vld [vmem:[#allocation10 + $0x88] sm:$0xff]
    %v306 = vld [vmem:[#allocation10 + $0x90] sm:$0xff]
    %v307 = vld [vmem:[#allocation10 + $0x98] sm:$0xff]
    %v308 = vld [vmem:[#allocation10 + $0xa0] sm:$0xff]
    %v309 = vld [vmem:[#allocation10 + $0xa8] sm:$0xff]
    %v310 = vld [vmem:[#allocation10 + $0xb0] sm:$0xff]
    %v311 = vld [vmem:[#allocation10 + $0xb8] sm:$0xff]
    %v312 = vld [vmem:[#allocation10 + $0xc0] sm:$0xff]
    %v313 = vld [vmem:[#allocation10 + $0xc8] sm:$0xff]
    %v314 = vld [vmem:[#allocation10 + $0xd0] sm:$0xff]
    %v315 = vld [vmem:[#allocation10 + $0xd8] sm:$0xff]
    %v316 = vld [vmem:[#allocation10 + $0xe0] sm:$0xff]
    %v317 = vld [vmem:[#allocation10 + $0xe8] sm:$0xff]
    %v318 = vld [vmem:[#allocation10 + $0xf0] sm:$0xff]
    %v319 = vld [vmem:[#allocation10 + $0xf8] sm:$0xff]
    %v320 = vld [vmem:[#allocation10 + $0x100] sm:$0xff]
    %v321 = vld [vmem:[#allocation10 + $0x108] sm:$0xff]
    %v322 = vld [vmem:[#allocation10 + $0x110] sm:$0xff]
    %v323 = vld [vmem:[#allocation10 + $0x118] sm:$0xff]
    %v324 = vld [vmem:[#allocation10 + $0x120] sm:$0xff]
    %v325 = vld [vmem:[#allocation10 + $0x128] sm:$0xff]
    %v326 = vld [vmem:[#allocation10 + $0x130] sm:$0xff]
    %v327 = vld [vmem:[#allocation10 + $0x138] sm:$0xff]
    %v328 = vld [vmem:[#allocation10 + $0x140] sm:$0xff]
    %v329 = vld [vmem:[#allocation10 + $0x148] sm:$0xff]
    %v330 = vld [vmem:[#allocation10 + $0x150] sm:$0xff]
    %v331 = vld [vmem:[#allocation10 + $0x158] sm:$0xff]
    %v332 = vld [vmem:[#allocation10 + $0x160] sm:$0xff]
    %v333 = vld [vmem:[#allocation10 + $0x168] sm:$0xff]
    %v334 = vld [vmem:[#allocation10 + $0x170] sm:$0xff]
    %v335 = vld [vmem:[#allocation10 + $0x178] sm:$0xff]
    %v336 = vld [vmem:[#allocation10 + $0x180] sm:$0xff]
    %v337 = vld [vmem:[#allocation10 + $0x188] sm:$0xff]
    %v338 = vld [vmem:[#allocation10 + $0x190] sm:$0xff]
    %v339 = vld [vmem:[#allocation10 + $0x198] sm:$0xff]
    %v340 = vld [vmem:[#allocation10 + $0x1a0] sm:$0xff]
    %v341 = vld [vmem:[#allocation10 + $0x1a8] sm:$0xff]
    %v342 = vld [vmem:[#allocation10 + $0x1b0] sm:$0xff]
    %v343 = vld [vmem:[#allocation10 + $0x1b8] sm:$0xff]
    %v344 = vld [vmem:[#allocation10 + $0x1c0] sm:$0xff]
    %v345 = vld [vmem:[#allocation10 + $0x1c8] sm:$0xff]
    %v346 = vld [vmem:[#allocation10 + $0x1d0] sm:$0xff]
    %v347 = vld [vmem:[#allocation10 + $0x1d8] sm:$0xff]
    %v348 = vld [vmem:[#allocation10 + $0x1e0] sm:$0xff]
    %v349 = vld [vmem:[#allocation10 + $0x1e8] sm:$0xff]
    %v350 = vld [vmem:[#allocation10 + $0x1f0] sm:$0xff]
    %v351 = vld [vmem:[#allocation10 + $0x1f8] sm:$0xff]
    %v352 = vld [vmem:[#allocation10 + $0x200] sm:$0xff]
    %v353 = vld [vmem:[#allocation10 + $0x208] sm:$0xff]
    %v354 = vld [vmem:[#allocation10 + $0x210] sm:$0xff]
    %v355 = vld [vmem:[#allocation10 + $0x218] sm:$0xff]
    %v356 = vld [vmem:[#allocation10 + $0x220] sm:$0xff]
    %v357 = vld [vmem:[#allocation10 + $0x228] sm:$0xff]
    %v358 = vld [vmem:[#allocation10 + $0x230] sm:$0xff]
    %v359 = vld [vmem:[#allocation10 + $0x238] sm:$0xff]
    %v360 = vld [vmem:[#allocation10 + $0x240] sm:$0xff]
    %v361 = vld [vmem:[#allocation10 + $0x248] sm:$0xff]
    %v362 = vld [vmem:[#allocation10 + $0x250] sm:$0xff]
    %v363 = vld [vmem:[#allocation10 + $0x258] sm:$0xff]
    %v364 = vld [vmem:[#allocation10 + $0x260] sm:$0xff]
    %v365 = vld [vmem:[#allocation10 + $0x268] sm:$0xff]
    %v366 = vld [vmem:[#allocation10 + $0x270] sm:$0xff]
    %v367 = vld [vmem:[#allocation10 + $0x278] sm:$0xff]
    %v368 = vld [vmem:[#allocation10 + $0x280] sm:$0xff]
    %v369 = vld [vmem:[#allocation10 + $0x288] sm:$0xff]
    %v370 = vld [vmem:[#allocation10 + $0x290] sm:$0xff]
    %v371 = vld [vmem:[#allocation10 + $0x298] sm:$0xff]
    %v372 = vld [vmem:[#allocation10 + $0x2a0] sm:$0xff]
    %v373 = vld [vmem:[#allocation10 + $0x2a8] sm:$0xff]
    %v374 = vld [vmem:[#allocation10 + $0x2b0] sm:$0xff]
    %v375 = vld [vmem:[#allocation10 + $0x2b8] sm:$0xff]
    %v376 = vld [vmem:[#allocation10 + $0x2c0] sm:$0xff]
    %v377 = vld [vmem:[#allocation10 + $0x2c8] sm:$0xff]
    %v378 = vld [vmem:[#allocation10 + $0x2d0] sm:$0xff]
    %v379 = vld [vmem:[#allocation10 + $0x2d8] sm:$0xff]
    %v380 = vld [vmem:[#allocation10 + $0x2e0] sm:$0xff]
    %v381 = vld [vmem:[#allocation10 + $0x2e8] sm:$0xff]
    %v382 = vld [vmem:[#allocation10 + $0x2f0] sm:$0xff]
    %v383 = vld [vmem:[#allocation10 + $0x2f8] sm:$0xff]
    %v384 = vld [vmem:[#allocation10 + $0x300] sm:$0xff]
    %v385 = vld [vmem:[#allocation10 + $0x308] sm:$0xff]
    %v386 = vld [vmem:[#allocation10 + $0x310] sm:$0xff]
    %v387 = vld [vmem:[#allocation10 + $0x318] sm:$0xff]
    %v388 = vld [vmem:[#allocation10 + $0x320] sm:$0xff]
    %v389 = vld [vmem:[#allocation10 + $0x328] sm:$0xff]
    %v390 = vld [vmem:[#allocation10 + $0x330] sm:$0xff]
    %v391 = vld [vmem:[#allocation10 + $0x338] sm:$0xff]
    %v392 = vld [vmem:[#allocation10 + $0x340] sm:$0xff]
    %v393 = vld [vmem:[#allocation10 + $0x348] sm:$0xff]
    %v394 = vld [vmem:[#allocation10 + $0x350] sm:$0xff]
    %v395 = vld [vmem:[#allocation10 + $0x358] sm:$0xff]
    %v396 = vld [vmem:[#allocation10 + $0x360] sm:$0xff]
    %v397 = vld [vmem:[#allocation10 + $0x368] sm:$0xff]
    %v398 = vld [vmem:[#allocation10 + $0x370] sm:$0xff]
    %v399 = vld [vmem:[#allocation10 + $0x378] sm:$0xff]
    %v400 = vld [vmem:[#allocation10 + $0x380] sm:$0xff]
    %v401 = vld [vmem:[#allocation10 + $0x388] sm:$0xff]
    %v402 = vld [vmem:[#allocation10 + $0x390] sm:$0xff]
    %v403 = vld [vmem:[#allocation10 + $0x398] sm:$0xff]
    %v404 = vld [vmem:[#allocation10 + $0x3a0] sm:$0xff]
    %v405 = vld [vmem:[#allocation10 + $0x3a8] sm:$0xff]
    %v406 = vld [vmem:[#allocation10 + $0x3b0] sm:$0xff]
    %v407 = vld [vmem:[#allocation10 + $0x3b8] sm:$0xff]
    %v408 = vld [vmem:[#allocation10 + $0x3c0] sm:$0xff]
    %v409 = vld [vmem:[#allocation10 + $0x3c8] sm:$0xff]
    %v410 = vld [vmem:[#allocation10 + $0x3d0] sm:$0xff]
    %v411 = vld [vmem:[#allocation10 + $0x3d8] sm:$0xff]
    %v412 = vld [vmem:[#allocation10 + $0x3e0] sm:$0xff]
    %v413 = vld [vmem:[#allocation10 + $0x3e8] sm:$0xff]
    %v414 = vld [vmem:[#allocation10 + $0x3f0] sm:$0xff]
    %v415 = vld [vmem:[#allocation10 + $0x3f8] sm:$0xff]
    %v416 = vld [vmem:[%s4] sm:$0x3]
    %v418 = vlaneseq
    %v419 = vshrl.u32 %v418, 7
    %v420 = vsub.s32 0, %v419
    %v421 = vrot.slane %v416, %v420
    %v422 = vlaneseq
    %v423 = vshrl.u32 %v422, 7
    %v424 = vsub.s32 1, %v423
    %v425 = vrot.slane %v416, %v424
    %428 = vmatprep.subr.mxu0 %v319
    %429 = vmatpush1.msra.mxu0 %v318
    %430 = vmatprep.subr.mxu0 %v317
    %431 = vmatpush1.msra.mxu0 %v316
    %432 = vmatprep.subr.mxu0 %v315
    %433 = vmatpush1.msra.mxu0 %v314
    %434 = vmatprep.subr.mxu0 %v313
    %435 = vmatpush1.msra.mxu0 %v312
    %436 = vmatprep.subr.mxu0 %v311
    %437 = vmatpush1.msra.mxu0 %v310
    %438 = vmatprep.subr.mxu0 %v309
    %439 = vmatpush1.msra.mxu0 %v308
    %440 = vmatprep.subr.mxu0 %v307
    %441 = vmatpush1.msra.mxu0 %v306
    %442 = vmatprep.subr.mxu0 %v305
    %443 = vmatpush1.msra.mxu0 %v304
    %444 = vmatprep.subr.mxu0 %v303
    %445 = vmatpush1.msra.mxu0 %v302
    %446 = vmatprep.subr.mxu0 %v301
    %447 = vmatpush1.msra.mxu0 %v300
    %448 = vmatprep.subr.mxu0 %v299
    %449 = vmatpush1.msra.mxu0 %v298
    %450 = vmatprep.subr.mxu0 %v297
    %451 = vmatpush1.msra.mxu0 %v296
    %452 = vmatprep.subr.mxu0 %v295
    %453 = vmatpush1.msra.mxu0 %v294
    %454 = vmatprep.subr.mxu0 %v293
    %455 = vmatpush1.msra.mxu0 %v292
    %456 = vmatprep.subr.mxu0 %v291
    %457 = vmatpush1.msra.mxu0 %v290
    %458 = vmatprep.subr.mxu0 %v289
    %459 = vmatpush1.msra.mxu0 %v288
    %460 = vmatprep.subr.mxu0 %v351
    %461 = vmatpush2.msra.mxu0 %v350
    %462 = vmatprep.subr.mxu0 %v349
    %463 = vmatpush2.msra.mxu0 %v348
    %464 = vmatprep.subr.mxu0 %v347
    %465 = vmatpush2.msra.mxu0 %v346
    %466 = vmatprep.subr.mxu0 %v345
    %467 = vmatpush2.msra.mxu0 %v344
    %468 = vmatprep.subr.mxu0 %v343
    %469 = vmatpush2.msra.mxu0 %v342
    %470 = vmatprep.subr.mxu0 %v341
    %471 = vmatpush2.msra.mxu0 %v340
    %472 = vmatprep.subr.mxu0 %v339
    %473 = vmatpush2.msra.mxu0 %v338
    %474 = vmatprep.subr.mxu0 %v337
    %475 = vmatpush2.msra.mxu0 %v336
    %476 = vmatprep.subr.mxu0 %v335
    %477 = vmatpush2.msra.mxu0 %v334
    %478 = vmatprep.subr.mxu0 %v333
    %479 = vmatpush2.msra.mxu0 %v332
    %480 = vmatprep.subr.mxu0 %v331
    %481 = vmatpush2.msra.mxu0 %v330
    %482 = vmatprep.subr.mxu0 %v329
    %483 = vmatpush2.msra.mxu0 %v328
    %484 = vmatprep.subr.mxu0 %v327
    %485 = vmatpush2.msra.mxu0 %v326
    %486 = vmatprep.subr.mxu0 %v325
    %487 = vmatpush2.msra.mxu0 %v324
    %488 = vmatprep.subr.mxu0 %v323
    %489 = vmatpush2.msra.mxu0 %v322
    %490 = vmatprep.subr.mxu0 %v321
    %491 = vmatpush2.msra.mxu0 %v320
    %492 = vmatprep.mubr.f32.mxu0 %v285
    %493 = vmatmul.mubr.f32.gmra.mxu0 %v284
    %v494 = vpop.f32.mrf.mxu0
    %v495 = vadd.f32 %v421, %v494
    %v496 = vpop.f32.mrf.mxu0
    %v497 = vadd.f32 %v425, %v496
    %498 = vdwg.mxu0
    %499 = vmatprep.subr.mxu0 %v383
    %500 = vmatpush1.msra.mxu0 %v382
    %501 = vmatprep.subr.mxu0 %v381
    %502 = vmatpush1.msra.mxu0 %v380
    %503 = vmatprep.subr.mxu0 %v379
    %504 = vmatpush1.msra.mxu0 %v378
    %505 = vmatprep.subr.mxu0 %v377
    %506 = vmatpush1.msra.mxu0 %v376
    %507 = vmatprep.subr.mxu0 %v375
    %508 = vmatpush1.msra.mxu0 %v374
    %509 = vmatprep.subr.mxu0 %v373
    %510 = vmatpush1.msra.mxu0 %v372
    %511 = vmatprep.subr.mxu0 %v371
    %512 = vmatpush1.msra.mxu0 %v370
    %513 = vmatprep.subr.mxu0 %v369
    %514 = vmatpush1.msra.mxu0 %v368
    %515 = vmatprep.subr.mxu0 %v367
    %516 = vmatpush1.msra.mxu0 %v366
    %517 = vmatprep.subr.mxu0 %v365
    %518 = vmatpush1.msra.mxu0 %v364
    %519 = vmatprep.subr.mxu0 %v363
    %520 = vmatpush1.msra.mxu0 %v362
    %521 = vmatprep.subr.mxu0 %v361
    %522 = vmatpush1.msra.mxu0 %v360
    %523 = vmatprep.subr.mxu0 %v359
    %524 = vmatpush1.msra.mxu0 %v358
    %525 = vmatprep.subr.mxu0 %v357
    %526 = vmatpush1.msra.mxu0 %v356
    %527 = vmatprep.subr.mxu0 %v355
    %528 = vmatpush1.msra.mxu0 %v354
    %529 = vmatprep.subr.mxu0 %v353
    %530 = vmatpush1.msra.mxu0 %v352
    %531 = vmatprep.subr.mxu0 %v415
    %532 = vmatpush2.msra.mxu0 %v414
    %533 = vmatprep.subr.mxu0 %v413
    %534 = vmatpush2.msra.mxu0 %v412
    %535 = vmatprep.subr.mxu0 %v411
    %536 = vmatpush2.msra.mxu0 %v410
    %537 = vmatprep.subr.mxu0 %v409
    %538 = vmatpush2.msra.mxu0 %v408
    %539 = vmatprep.subr.mxu0 %v407
    %540 = vmatpush2.msra.mxu0 %v406
    %541 = vmatprep.subr.mxu0 %v405
    %542 = vmatpush2.msra.mxu0 %v404
    %543 = vmatprep.subr.mxu0 %v403
    %544 = vmatpush2.msra.mxu0 %v402
    %545 = vmatprep.subr.mxu0 %v401
    %546 = vmatpush2.msra.mxu0 %v400
    %547 = vmatprep.subr.mxu0 %v399
    %548 = vmatpush2.msra.mxu0 %v398
    %549 = vmatprep.subr.mxu0 %v397
    %550 = vmatpush2.msra.mxu0 %v396
    %551 = vmatprep.subr.mxu0 %v395
    %552 = vmatpush2.msra.mxu0 %v394
    %553 = vmatprep.subr.mxu0 %v393
    %554 = vmatpush2.msra.mxu0 %v392
    %555 = vmatprep.subr.mxu0 %v391
    %556 = vmatpush2.msra.mxu0 %v390
    %557 = vmatprep.subr.mxu0 %v389
    %558 = vmatpush2.msra.mxu0 %v388
    %559 = vmatprep.subr.mxu0 %v387
    %560 = vmatpush2.msra.mxu0 %v386
    %561 = vmatprep.subr.mxu0 %v385
    %562 = vmatpush2.msra.mxu0 %v384
    %563 = vmatprep.mubr.f32.mxu0 %v287
    %564 = vmatmul.mubr.f32.gmra.mxu0 %v286
    %v565 = vpop.f32.mrf.mxu0
    %v566 = vadd.f32 %v495, %v565
    %v567 = vpop.f32.mrf.mxu0
    %v568 = vadd.f32 %v497, %v567
    %569 = vdwg.mxu0
    %v570 = vmax.f32 %v566, 0.0
    %v571 = vmax.f32 %v568, 0.0
    %572 = vst [vmem:[#allocation3] sm:$0xff] %v570
    %573 = vst [vmem:[#allocation3 + $0x8] sm:$0xff] %v571
    %v574 = vld [vmem:[#allocation3] sm:$0xff]
    %v575 = vld [vmem:[#allocation3 + $0x8] sm:$0xff]
    %v576 = vld [vmem:[#allocation12] sm:$0xff]
    %v577 = vld [vmem:[#allocation12 + $0x8] sm:$0xff]
    %v578 = vld [vmem:[#allocation12 + $0x10] sm:$0xff]
    %v579 = vld [vmem:[#allocation12 + $0x18] sm:$0xff]
    %v580 = vld [vmem:[#allocation12 + $0x20] sm:$0xff]
    %v581 = vld [vmem:[#allocation12 + $0x28] sm:$0xff]
    %v582 = vld [vmem:[#allocation12 + $0x30] sm:$0xff]
    %v583 = vld [vmem:[#allocation12 + $0x38] sm:$0xff]
    %v584 = vld [vmem:[#allocation12 + $0x40] sm:$0xff]
    %v585 = vld [vmem:[#allocation12 + $0x48] sm:$0xff]
    %v586 = vld [vmem:[#allocation12 + $0x50] sm:$0xff]
    %v587 = vld [vmem:[#allocation12 + $0x58] sm:$0xff]
    %v588 = vld [vmem:[#allocation12 + $0x60] sm:$0xff]
    %v589 = vld [vmem:[#allocation12 + $0x68] sm:$0xff]
    %v590 = vld [vmem:[#allocation12 + $0x70] sm:$0xff]
    %v591 = vld [vmem:[#allocation12 + $0x78] sm:$0xff]
    %v592 = vld [vmem:[#allocation12 + $0x80] sm:$0xff]
    %v593 = vld [vmem:[#allocation12 + $0x88] sm:$0xff]
    %v594 = vld [vmem:[#allocation12 + $0x90] sm:$0xff]
    %v595 = vld [vmem:[#allocation12 + $0x98] sm:$0xff]
    %v596 = vld [vmem:[#allocation12 + $0xa0] sm:$0xff]
    %v597 = vld [vmem:[#allocation12 + $0xa8] sm:$0xff]
    %v598 = vld [vmem:[#allocation12 + $0xb0] sm:$0xff]
    %v599 = vld [vmem:[#allocation12 + $0xb8] sm:$0xff]
    %v600 = vld [vmem:[#allocation12 + $0xc0] sm:$0xff]
    %v601 = vld [vmem:[#allocation12 + $0xc8] sm:$0xff]
    %v602 = vld [vmem:[#allocation12 + $0xd0] sm:$0xff]
    %v603 = vld [vmem:[#allocation12 + $0xd8] sm:$0xff]
    %v604 = vld [vmem:[#allocation12 + $0xe0] sm:$0xff]
    %v605 = vld [vmem:[#allocation12 + $0xe8] sm:$0xff]
    %v606 = vld [vmem:[#allocation12 + $0xf0] sm:$0xff]
    %v607 = vld [vmem:[#allocation12 + $0xf8] sm:$0xff]
    %v608 = vld [vmem:[%s6] sm:$0x1]
    %v610 = vlaneseq
    %v611 = vshrl.u32 %v610, 7
    %v612 = vsub.s32 0, %v611
    %v613 = vrot.slane %v608, %v612
    %615 = vmatprep.subr.mxu0 0.0
    %616 = vmatpush1.msra.mxu0 %v591
    %617 = vmatprep.subr.mxu0 0.0
    %618 = vmatpush1.msra.mxu0 %v590
    %619 = vmatprep.subr.mxu0 0.0
    %620 = vmatpush1.msra.mxu0 %v589
    %621 = vmatprep.subr.mxu0 0.0
    %622 = vmatpush1.msra.mxu0 %v588
    %623 = vmatprep.subr.mxu0 0.0
    %624 = vmatpush1.msra.mxu0 %v587
    %625 = vmatprep.subr.mxu0 0.0
    %626 = vmatpush1.msra.mxu0 %v586
    %627 = vmatprep.subr.mxu0 0.0
    %628 = vmatpush1.msra.mxu0 %v585
    %629 = vmatprep.subr.mxu0 0.0
    %630 = vmatpush1.msra.mxu0 %v584
    %631 = vmatprep.subr.mxu0 0.0
    %632 = vmatpush1.msra.mxu0 %v583
    %633 = vmatprep.subr.mxu0 0.0
    %634 = vmatpush1.msra.mxu0 %v582
    %635 = vmatprep.subr.mxu0 0.0
    %636 = vmatpush1.msra.mxu0 %v581
    %637 = vmatprep.subr.mxu0 0.0
    %638 = vmatpush1.msra.mxu0 %v580
    %639 = vmatprep.subr.mxu0 0.0
    %640 = vmatpush1.msra.mxu0 %v579
    %641 = vmatprep.subr.mxu0 0.0
    %642 = vmatpush1.msra.mxu0 %v578
    %643 = vmatprep.subr.mxu0 0.0
    %644 = vmatpush1.msra.mxu0 %v577
    %645 = vmatprep.subr.mxu0 0.0
    %646 = vmatpush1.msra.mxu0 %v576
    %647 = vmatprep.subr.mxu0 0.0
    %648 = vmatpush2.msra.mxu0 %v607
    %649 = vmatprep.subr.mxu0 0.0
    %650 = vmatpush2.msra.mxu0 %v606
    %651 = vmatprep.subr.mxu0 0.0
    %652 = vmatpush2.msra.mxu0 %v605
    %653 = vmatprep.subr.mxu0 0.0
    %654 = vmatpush2.msra.mxu0 %v604
    %655 = vmatprep.subr.mxu0 0.0
    %656 = vmatpush2.msra.mxu0 %v603
    %657 = vmatprep.subr.mxu0 0.0
    %658 = vmatpush2.msra.mxu0 %v602
    %659 = vmatprep.subr.mxu0 0.0
    %660 = vmatpush2.msra.mxu0 %v601
    %661 = vmatprep.subr.mxu0 0.0
    %662 = vmatpush2.msra.mxu0 %v600
    %663 = vmatprep.subr.mxu0 0.0
    %664 = vmatpush2.msra.mxu0 %v599
    %665 = vmatprep.subr.mxu0 0.0
    %666 = vmatpush2.msra.mxu0 %v598
    %667 = vmatprep.subr.mxu0 0.0
    %668 = vmatpush2.msra.mxu0 %v597
    %669 = vmatprep.subr.mxu0 0.0
    %670 = vmatpush2.msra.mxu0 %v596
    %671 = vmatprep.subr.mxu0 0.0
    %672 = vmatpush2.msra.mxu0 %v595
    %673 = vmatprep.subr.mxu0 0.0
    %674 = vmatpush2.msra.mxu0 %v594
    %675 = vmatprep.subr.mxu0 0.0
    %676 = vmatpush2.msra.mxu0 %v593
    %677 = vmatprep.subr.mxu0 0.0
    %678 = vmatpush2.msra.mxu0 %v592
    %679 = vmatprep.mubr.f32.mxu0 %v575
    %680 = vmatmul.mubr.f32.gmra.mxu0 %v574
    %v681 = vpop.f32.mrf.mxu0
    %v682 = vadd.f32 %v613, %v681
    %v683 = vpop.f32.mrf.mxu0
    %684 = vdwg.mxu0
    %685 = vst [vmem:[#allocation13] sm:$0xff] %v682
    // Predicated region
    $region50: #{tpu_custom_call.1} parent=1 // pred_check
      _
    $region51: #{tpu_custom_call.1} parent=1 // pred_check_branch
      %687 = sbr.rel (0) target = $region53
    $region52: #{tpu_custom_call.1} parent=1 // pred_region
      %s689 = ssub.s32 128, 128
      %690 = vsyncadd [#allocation6], %s689
      %s692 = sshll.u32 [#allocation13], 4
      %s693 = int_to_ptr.vmem [resolvable:$true] %s692
      %695 = dma.vmem_to_hbm [thread:$0]  %s693, 128, %s7, [#allocation6]
    $region53: #{tpu_custom_call.1} parent=1 // pred_fallthru
      _
    // Predicated region
    $region54: #{tpu_custom_call.1} parent=1 // pred_check
      _
    $region55: #{tpu_custom_call.1} parent=1 // pred_check_branch
      %697 = sbr.rel (0) target = $region57
    $region56: #{tpu_custom_call.1} parent=1 // pred_region
      %698 = dma.done [#allocation6], 128
    $region57: #{tpu_custom_call.1} parent=1 // pred_fallthru
      _
    %699 = vsyncpa [#allocation5], 1
    %700 = vsyncpa [#allocation8], 1
    %701 = vsyncpa [#allocation11], 1
    %702 = vsyncpa [#allocation6], 1

</llo_original>
